<compile_context>
chip_gen: v5e
topology: v5e:2x2
jax: 0.10.0
libtpu: 0.0.40
codegen_flags: <defaults>
</compile_context>

<pallas_src>
import functools

import jax
import jax.numpy as jnp
import numpy as np
from jax import lax
from jax.experimental import pallas as pl
from jax.experimental.pallas import tpu as pltpu

BN_EPS = 1e-5
LANE = 128
SUBLANE = 8


def _round_up(n, m):
    return ((n + m - 1) // m) * m


# ---------------------------------------------------------------------------
# Fused single-tile path: layer1 -> tanh -> BN (batch stats) -> layer2.
# Whole (padded) batch lives in VMEM; hidden activations never touch HBM.
# ---------------------------------------------------------------------------
def _fused_kernel(x_ref, w1_ref, b1_ref, gamma_ref, beta_ref, w2_ref, b2_ref,
                  o_ref, *, batch):
    # Layer 1 on the MXU: cast x in-kernel (single HBM pass over x).
    x = x_ref[...].astype(jnp.bfloat16)
    h = jnp.tanh(jnp.dot(x, w1_ref[...], preferred_element_type=jnp.float32)
                 + b1_ref[...])                                   # (Bp,128) f32

    # Batch statistics via a masked ones-row MXU dot (padded rows excluded).
    rows = lax.broadcasted_iota(jnp.int32, (1, h.shape[0]), 1)
    mask = (rows < batch).astype(jnp.float32)                     # (1, Bp)
    inv_b = 1.0 / batch
    mean = jnp.dot(mask, h, preferred_element_type=jnp.float32) * inv_b
    ex2 = jnp.dot(mask, h * h, preferred_element_type=jnp.float32) * inv_b
    var = ex2 - mean * mean                                       # biased (PyTorch)

    scale = gamma_ref[...] * lax.rsqrt(var + BN_EPS)
    shift = beta_ref[...] - mean * scale
    hn = (h * scale + shift).astype(jnp.bfloat16)

    out = jnp.dot(hn, w2_ref[...], preferred_element_type=jnp.float32)
    o_ref[...] = (out + b2_ref[...]).astype(o_ref.dtype)


# ---------------------------------------------------------------------------
# Tiled pass 1: layer1 + tanh, cache activations (bf16), per-tile partial
# batch statistics (no cross-tile accumulator -> "parallel" grid axis).
# ---------------------------------------------------------------------------
def _stats_kernel(x_ref, w1_ref, b1_ref, h_ref, sum_ref, sq_ref,
                  *, batch, block_b):
    t = pl.program_id(0)

    x = x_ref[...].astype(jnp.bfloat16)
    h = jnp.tanh(jnp.dot(x, w1_ref[...], preferred_element_type=jnp.float32)
                 + b1_ref[...])                                   # (TB,128) f32
    h_ref[...] = h.astype(h_ref.dtype)                            # bf16 cache

    # Masked ones rows (8, TB) -> reductions over batch routed through the MXU
    # (8 identical result rows; wrapper reads row 0 of each tile block).
    rows = t * block_b + lax.broadcasted_iota(jnp.int32, (SUBLANE, block_b), 1)
    mask = (rows < batch).astype(jnp.float32)
    sum_ref[...] = jnp.dot(mask, h, preferred_element_type=jnp.float32)[None]
    sq_ref[...] = jnp.dot(mask, h * h, preferred_element_type=jnp.float32)[None]


# ---------------------------------------------------------------------------
# Tiled pass 2: out = h @ w2_fold + b2_fold (BatchNorm folded into weights).
# ---------------------------------------------------------------------------
def _decode_kernel(h_ref, w2_ref, b2_ref, o_ref):
    out = jnp.dot(h_ref[...], w2_ref[...], preferred_element_type=jnp.float32)
    o_ref[...] = (out + b2_ref[...]).astype(o_ref.dtype)


def pocket_decoder(x, w1, b1, gamma, beta, w2, b2, *, block_b=256,
                   fused_max_batch=1024):
    """Pocket_decoder.forward with training-mode BatchNorm statistics.

    x:  (B, 512) f32
    w1: (128, 512) f32, b1: (128,) f32      -- layer1 (PyTorch layout)
    gamma, beta: (128,) f32                 -- BatchNorm1d affine params
    w2: (F, 128) f32, b2: (F,) f32          -- layer2 (PyTorch layout)
    returns (B, F) f32
    """
    B, IN = x.shape
    HID = w1.shape[0]
    F = w2.shape[0]

    F_pad = _round_up(F, LANE)                        # lane-dense output width
    w1_t = w1.T.astype(jnp.bfloat16)                  # (512, 128)
    b1_row = b1.reshape(1, HID).astype(jnp.float32)

    # ------------------------- fused small-batch path ------------------------
    B_fused = _round_up(B, SUBLANE)
    if B_fused <= fused_max_batch:
        x_p = x if B_fused == B else jnp.pad(x, ((0, B_fused - B), (0, 0)))
        w2_t = w2.T
        b2_p = b2
        if F_pad != F:
            w2_t = jnp.pad(w2_t, ((0, 0), (0, F_pad - F)))
            b2_p = jnp.pad(b2_p, (0, F_pad - F))
        out = pl.pallas_call(
            functools.partial(_fused_kernel, batch=B),
            out_shape=jax.ShapeDtypeStruct((B_fused, F_pad), jnp.float32),
        )(x_p, w1_t, b1_row,
          gamma.reshape(1, HID).astype(jnp.float32),
          beta.reshape(1, HID).astype(jnp.float32),
          w2_t.astype(jnp.bfloat16),
          b2_p.reshape(1, F_pad).astype(jnp.float32))
        return out[:B, :F]

    # --------------------------- two-pass tiled path -------------------------
    TB = _round_up(min(block_b, _round_up(B, SUBLANE)), SUBLANE)
    B_pad = _round_up(B, TB)
    n_tiles = B_pad // TB
    x_p = x if B_pad == B else jnp.pad(x, ((0, B_pad - B), (0, 0)))

    # Pass 1: activations (bf16 cache) + per-tile partial batch statistics.
    h_bf, psum, psq = pl.pallas_call(
        functools.partial(_stats_kernel, batch=B, block_b=TB),
        grid=(n_tiles,),
        in_specs=[
            pl.BlockSpec((TB, IN), lambda t: (t, 0)),
            pl.BlockSpec((IN, HID), lambda t: (0, 0)),
            pl.BlockSpec((1, HID), lambda t: (0, 0)),
        ],
        out_specs=(
            pl.BlockSpec((TB, HID), lambda t: (t, 0)),
            pl.BlockSpec((1, SUBLANE, HID), lambda t: (t, 0, 0)),
            pl.BlockSpec((1, SUBLANE, HID), lambda t: (t, 0, 0)),
        ),
        out_shape=(
            jax.ShapeDtypeStruct((B_pad, HID), jnp.bfloat16),
            jax.ShapeDtypeStruct((n_tiles, SUBLANE, HID), jnp.float32),
            jax.ShapeDtypeStruct((n_tiles, SUBLANE, HID), jnp.float32),
        ),
        compiler_params=pltpu.CompilerParams(
            dimension_semantics=("parallel",)),
    )(x_p, w1_t, b1_row)

    # Fold training-mode BatchNorm into layer2 (one-time, tiny).
    mean = psum[:, 0, :].sum(axis=0) / B
    ex2 = psq[:, 0, :].sum(axis=0) / B
    var = ex2 - mean * mean                           # biased (PyTorch)
    scale = gamma * lax.rsqrt(var + BN_EPS)           # (128,)
    shift = beta - mean * scale                       # (128,)

    w2_t = w2.T.astype(jnp.float32)                   # (128, F)
    w2_fold = w2_t * scale[:, None]
    b2_fold = b2 + shift @ w2_t
    if F_pad != F:
        w2_fold = jnp.pad(w2_fold, ((0, 0), (0, F_pad - F)))
        b2_fold = jnp.pad(b2_fold, (0, F_pad - F))

    # Pass 2: lane-dense second matmul, megacore-parallel over batch tiles.
    out = pl.pallas_call(
        _decode_kernel,
        grid=(n_tiles,),
        in_specs=[
            pl.BlockSpec((TB, HID), lambda t: (t, 0)),
            pl.BlockSpec((HID, F_pad), lambda t: (0, 0)),
            pl.BlockSpec((1, F_pad), lambda t: (0, 0)),
        ],
        out_specs=pl.BlockSpec((TB, F_pad), lambda t: (t, 0)),
        out_shape=jax.ShapeDtypeStruct((B_pad, F_pad), jnp.float32),
        compiler_params=pltpu.CompilerParams(
            dimension_semantics=("parallel",)),
    )(h_bf, w2_fold.astype(jnp.bfloat16),
      b2_fold.reshape(1, F_pad).astype(jnp.float32))

    return out[:B, :F]


def reference(x, w1, b1, gamma, beta, w2, b2):
    """Pure f32 JAX reference matching the PyTorch forward semantics."""
    h = x @ w1.T + b1
    h = jnp.tanh(h)
    mean = jnp.mean(h, axis=0, keepdims=True)
    var = jnp.mean((h - mean) ** 2, axis=0, keepdims=True)   # biased
    h = (h - mean) / jnp.sqrt(var + BN_EPS)
    h = h * gamma + beta
    return h @ w2.T + b2


if __name__ == "__main__":
    IN, HID = 512, 128
    NUM_FEATURES = 64

    key = jax.random.PRNGKey(0)
    kx1, kx2, k1w, k1b, k2w, k2b, kg, kbt = jax.random.split(key, 8)

    # PyTorch-Linear-style uniform init.
    bound1 = 1.0 / np.sqrt(IN)
    w1 = jax.random.uniform(k1w, (HID, IN), jnp.float32, -bound1, bound1)
    b1 = jax.random.uniform(k1b, (HID,), jnp.float32, -bound1, bound1)
    bound2 = 1.0 / np.sqrt(HID)
    w2 = jax.random.uniform(k2w, (NUM_FEATURES, HID), jnp.float32, -bound2, bound2)
    b2 = jax.random.uniform(k2b, (NUM_FEATURES,), jnp.float32, -bound2, bound2)
    # Non-trivial BN affine params to exercise the normalization (default 1/0).
    gamma = jax.random.uniform(kg, (HID,), jnp.float32, 0.5, 1.5)
    beta = jax.random.uniform(kbt, (HID,), jnp.float32, -0.5, 0.5)

    # 1) Small batch -> fused single-tile path (B=10 also exercises the
    #    padded-row masking of the batch statistics).
    B1 = 10
    x1 = jax.random.normal(kx1, (B1, IN), jnp.float32)
    fwd_fused = jax.jit(pocket_decoder)
    out1 = jax.block_until_ready(fwd_fused(x1, w1, b1, gamma, beta, w2, b2))
    ref1 = reference(x1, w1, b1, gamma, beta, w2, b2)
    np.testing.assert_allclose(np.asarray(out1), np.asarray(ref1),
                               rtol=2e-2, atol=3e-2)

    # 2) Two-pass tiled path, forced with a tiny batch tile so the pipelined
    #    path (3 tiles, padded last tile) is exercised at small shapes.
    B2 = 40
    x2 = jax.random.normal(kx2, (B2, IN), jnp.float32)
    fwd_tiled = jax.jit(functools.partial(pocket_decoder, block_b=16,
                                          fused_max_batch=0))
    out2 = jax.block_until_ready(fwd_tiled(x2, w1, b1, gamma, beta, w2, b2))
    ref2 = reference(x2, w1, b1, gamma, beta, w2, b2)
    np.testing.assert_allclose(np.asarray(out2), np.asarray(ref2),
                               rtol=2e-2, atol=3e-2)

    print("KERNEL_OK")
</pallas_src>

<mosaic_0001>
module attributes {stable_mosaic.version = 11 : i64} {
  func.func @_fused_kernel(%arg0: memref<16x512xf32, #tpu.memory_space<vmem>>, %arg1: memref<512x128xbf16, #tpu.memory_space<vmem>>, %arg2: memref<1x128xf32, #tpu.memory_space<vmem>>, %arg3: memref<1x128xf32, #tpu.memory_space<vmem>>, %arg4: memref<1x128xf32, #tpu.memory_space<vmem>>, %arg5: memref<128x128xbf16, #tpu.memory_space<vmem>>, %arg6: memref<1x128xf32, #tpu.memory_space<vmem>>, %arg7: memref<16x128xf32, #tpu.memory_space<vmem>>) attributes {dimension_semantics = [], scalar_prefetch = 0 : i64, scratch_operands = 0 : i64, tpu.core_type = #tpu.core_type<tc>} {
    %c0 = arith.constant 0 : index
    %c0_0 = arith.constant 0 : index
    %0 = vector.load %arg0[%c0, %c0_0] : memref<16x512xf32, #tpu.memory_space<vmem>>, vector<16x512xf32>
    %1 = arith.truncf %0 : vector<16x512xf32> to vector<16x512xbf16>
    %c0_1 = arith.constant 0 : index
    %c0_2 = arith.constant 0 : index
    %2 = vector.load %arg1[%c0_1, %c0_2] : memref<512x128xbf16, #tpu.memory_space<vmem>>, vector<512x128xbf16>
    %cst = arith.constant dense<0.000000e+00> : vector<16x128xf32>
    %3 = tpu.matmul %1, %2, %cst {dimension_numbers = #tpu.dot_dimension_numbers<[1], [0], [0], [1], [0, 0, 1, 1], [], []>} : vector<16x512xbf16>, vector<512x128xbf16>, vector<16x128xf32> -> vector<16x128xf32>
    %c0_3 = arith.constant 0 : index
    %c0_4 = arith.constant 0 : index
    %4 = vector.load %arg2[%c0_3, %c0_4] : memref<1x128xf32, #tpu.memory_space<vmem>>, vector<1x128xf32>
    %5 = vector.broadcast %4 : vector<1x128xf32> to vector<16x128xf32>
    %6 = arith.addf %3, %5 : vector<16x128xf32>
    %7 = math.tanh %6 : vector<16x128xf32>
    %8 = tpu.iota {dimensions = array<i32: 1>} : vector<1x16xi32>
    %c10_i32 = arith.constant 10 : i32
    %9 = vector.broadcast %c10_i32 : i32 to vector<1x16xi32>
    %10 = arith.cmpi slt, %8, %9 : vector<1x16xi32>
    %11 = arith.extui %10 : vector<1x16xi1> to vector<1x16xi32>
    %12 = arith.sitofp %11 : vector<1x16xi32> to vector<1x16xf32>
    %cst_5 = arith.constant dense<0.000000e+00> : vector<1x128xf32>
    %13 = tpu.matmul %12, %7, %cst_5 {dimension_numbers = #tpu.dot_dimension_numbers<[1], [0], [0], [1], [0, 0, 1, 1], [], []>} : vector<1x16xf32>, vector<16x128xf32>, vector<1x128xf32> -> vector<1x128xf32>
    %cst_6 = arith.constant 1.000000e-01 : f32
    %14 = vector.broadcast %cst_6 : f32 to vector<1x128xf32>
    %15 = arith.mulf %13, %14 : vector<1x128xf32>
    %16 = arith.mulf %7, %7 : vector<16x128xf32>
    %cst_7 = arith.constant dense<0.000000e+00> : vector<1x128xf32>
    %17 = tpu.matmul %12, %16, %cst_7 {dimension_numbers = #tpu.dot_dimension_numbers<[1], [0], [0], [1], [0, 0, 1, 1], [], []>} : vector<1x16xf32>, vector<16x128xf32>, vector<1x128xf32> -> vector<1x128xf32>
    %cst_8 = arith.constant 1.000000e-01 : f32
    %18 = vector.broadcast %cst_8 : f32 to vector<1x128xf32>
    %19 = arith.mulf %17, %18 : vector<1x128xf32>
    %20 = arith.mulf %15, %15 : vector<1x128xf32>
    %21 = arith.subf %19, %20 : vector<1x128xf32>
    %c0_9 = arith.constant 0 : index
    %c0_10 = arith.constant 0 : index
    %22 = vector.load %arg3[%c0_9, %c0_10] : memref<1x128xf32, #tpu.memory_space<vmem>>, vector<1x128xf32>
    %cst_11 = arith.constant 9.99999974E-6 : f32
    %23 = vector.broadcast %cst_11 : f32 to vector<1x128xf32>
    %24 = arith.addf %21, %23 : vector<1x128xf32>
    %25 = math.rsqrt %24 : vector<1x128xf32>
    %26 = arith.mulf %22, %25 : vector<1x128xf32>
    %c0_12 = arith.constant 0 : index
    %c0_13 = arith.constant 0 : index
    %27 = vector.load %arg4[%c0_12, %c0_13] : memref<1x128xf32, #tpu.memory_space<vmem>>, vector<1x128xf32>
    %28 = arith.mulf %15, %26 : vector<1x128xf32>
    %29 = arith.subf %27, %28 : vector<1x128xf32>
    %30 = vector.broadcast %26 : vector<1x128xf32> to vector<16x128xf32>
    %31 = arith.mulf %7, %30 : vector<16x128xf32>
    %32 = vector.broadcast %29 : vector<1x128xf32> to vector<16x128xf32>
    %33 = arith.addf %31, %32 : vector<16x128xf32>
    %34 = arith.truncf %33 : vector<16x128xf32> to vector<16x128xbf16>
    %c0_14 = arith.constant 0 : index
    %c0_15 = arith.constant 0 : index
    %35 = vector.load %arg5[%c0_14, %c0_15] : memref<128x128xbf16, #tpu.memory_space<vmem>>, vector<128x128xbf16>
    %cst_16 = arith.constant dense<0.000000e+00> : vector<16x128xf32>
    %36 = tpu.matmul %34, %35, %cst_16 {dimension_numbers = #tpu.dot_dimension_numbers<[1], [0], [0], [1], [0, 0, 1, 1], [], []>} : vector<16x128xbf16>, vector<128x128xbf16>, vector<16x128xf32> -> vector<16x128xf32>
    %c0_17 = arith.constant 0 : index
    %c0_18 = arith.constant 0 : index
    %37 = vector.load %arg6[%c0_17, %c0_18] : memref<1x128xf32, #tpu.memory_space<vmem>>, vector<1x128xf32>
    %38 = vector.broadcast %37 : vector<1x128xf32> to vector<16x128xf32>
    %39 = arith.addf %36, %38 : vector<16x128xf32>
    %c0_19 = arith.constant 0 : index
    %c0_20 = arith.constant 0 : index
    %40 = vector.load %arg7[%c0_19, %c0_20] : memref<16x128xf32, #tpu.memory_space<vmem>>, vector<16x128xf32>
    tpu.vector_store %arg7[%c0_19, %c0_20], %39 {strides = array<i32>} : memref<16x128xf32, #tpu.memory_space<vmem>>, vector<16x128xf32>,
    return
  }
}

</mosaic_0001>

<llo_original>
// kernel: pocket_decoder.1
$region0: #{pocket_decoder.1}
  #allocation0 [shape = 'u32[]', space=smem, size = 0x4, offset = 0x4, fixed_abs, tag = 'smem constant byte address 0x4 - core index']
  #allocation1 [shape = 'u32[72,128]{1,0:T(1,128)}', space=vmem, size = 0x9000, scoped, tag = 'internal scratch']
  %s0 = inlined_call_operand.vmem [shape: f32[16,512], index: 0, kind: input, shape index: {}]
  %s1 = inlined_call_operand.vmem [shape: bf16[512,128], index: 1, kind: input, shape index: {}]
  %s2 = inlined_call_operand.vmem [shape: f32[1,128], index: 2, kind: input, shape index: {}]
  %s3 = inlined_call_operand.vmem [shape: f32[1,128], index: 3, kind: input, shape index: {}]
  %s4 = inlined_call_operand.vmem [shape: f32[1,128], index: 4, kind: input, shape index: {}]
  %s5 = inlined_call_operand.vmem [shape: bf16[128,128], index: 5, kind: input, shape index: {}]
  %s6 = inlined_call_operand.vmem [shape: f32[1,128], index: 6, kind: input, shape index: {}]
  %s7 = inlined_call_operand.hbm [shape: f32[16,128], index: 7, kind: output, shape index: {}]
  %s8 = sld [smem:[#allocation0]]
  $region38: #{pocket_decoder.1} parent=0
    _
  %s10 = ssub.s32 1, %s8
  %s11 = scalar_select 0, %s10, %s8
  $region1: #{pocket_decoder.1} parent=0
    #allocation2 [shape = 'u8[8192]{0}', space=vmem, size = 0x2000, scoped, tag = 'output window, operand 0, single buffered']
    #allocation3 [shape = 's32[1]{0}', space=sflag, size = 0x4, scoped, tag = 'scoped memory for pocket_decoder.1']
    %12 = vsyncpa [#allocation3], 0
    // Predicated region
    $region2: #{pocket_decoder.1} parent=1 // pred_check
      _
    $region3: #{pocket_decoder.1} parent=1 // pred_check_branch
      %14 = sbr.rel (0) target = $region5
    $region4: #{pocket_decoder.1} parent=1 // pred_region
      _
    $region5: #{pocket_decoder.1} parent=1 // pred_fallthru
      _
    // Predicated region
    $region6: #{pocket_decoder.1} parent=1 // pred_check
      _
    $region7: #{pocket_decoder.1} parent=1 // pred_check_branch
      %16 = sbr.rel (0) target = $region9
    $region8: #{pocket_decoder.1} parent=1 // pred_region
      _
    $region9: #{pocket_decoder.1} parent=1 // pred_fallthru
      _
    // Predicated region
    $region10: #{pocket_decoder.1} parent=1 // pred_check
      _
    $region11: #{pocket_decoder.1} parent=1 // pred_check_branch
      %18 = sbr.rel (0) target = $region13
    $region12: #{pocket_decoder.1} parent=1 // pred_region
      _
    $region13: #{pocket_decoder.1} parent=1 // pred_fallthru
      _
    // Predicated region
    $region14: #{pocket_decoder.1} parent=1 // pred_check
      _
    $region15: #{pocket_decoder.1} parent=1 // pred_check_branch
      %20 = sbr.rel (0) target = $region17
    $region16: #{pocket_decoder.1} parent=1 // pred_region
      _
    $region17: #{pocket_decoder.1} parent=1 // pred_fallthru
      _
    // Predicated region
    $region18: #{pocket_decoder.1} parent=1 // pred_check
      _
    $region19: #{pocket_decoder.1} parent=1 // pred_check_branch
      %22 = sbr.rel (0) target = $region21
    $region20: #{pocket_decoder.1} parent=1 // pred_region
      _
    $region21: #{pocket_decoder.1} parent=1 // pred_fallthru
      _
    // Predicated region
    $region22: #{pocket_decoder.1} parent=1 // pred_check
      _
    $region23: #{pocket_decoder.1} parent=1 // pred_check_branch
      %24 = sbr.rel (0) target = $region25
    $region24: #{pocket_decoder.1} parent=1 // pred_region
      _
    $region25: #{pocket_decoder.1} parent=1 // pred_fallthru
      _
    // Predicated region
    $region26: #{pocket_decoder.1} parent=1 // pred_check
      _
    $region27: #{pocket_decoder.1} parent=1 // pred_check_branch
      %26 = sbr.rel (0) target = $region29
    $region28: #{pocket_decoder.1} parent=1 // pred_region
      _
    $region29: #{pocket_decoder.1} parent=1 // pred_fallthru
      _
    %v27 = vld [vmem:[%s0] sm:$0xff]
    %v28 = vld [vmem:[%s0 + $0x8] sm:$0xff]
    %v29 = vld [vmem:[%s0 + $0x10] sm:$0xff]
    %v30 = vld [vmem:[%s0 + $0x18] sm:$0xff]
    %v31 = vld [vmem:[%s0 + $0x20] sm:$0xff]
    %v32 = vld [vmem:[%s0 + $0x28] sm:$0xff]
    %v33 = vld [vmem:[%s0 + $0x30] sm:$0xff]
    %v34 = vld [vmem:[%s0 + $0x38] sm:$0xff]
    %v35 = vpack.c.bf16 %v31, %v27
    %v36 = vpack.c.bf16 %v32, %v28
    %v37 = vpack.c.bf16 %v33, %v29
    %v38 = vpack.c.bf16 %v34, %v30
    %v39 = vld [vmem:[%s1] sm:$0xf]
    %v40 = vld [vmem:[%s1 + $0x4] sm:$0xf]
    %v41 = vld [vmem:[%s1 + $0x8] sm:$0xf]
    %v42 = vld [vmem:[%s1 + $0xc] sm:$0xf]
    %v43 = vld [vmem:[%s1 + $0x10] sm:$0xf]
    %v44 = vld [vmem:[%s1 + $0x14] sm:$0xf]
    %v45 = vld [vmem:[%s1 + $0x18] sm:$0xf]
    %v46 = vld [vmem:[%s1 + $0x1c] sm:$0xf]
    %v47 = vld [vmem:[%s1 + $0x20] sm:$0xf]
    %v48 = vld [vmem:[%s1 + $0x24] sm:$0xf]
    %v49 = vld [vmem:[%s1 + $0x28] sm:$0xf]
    %v50 = vld [vmem:[%s1 + $0x2c] sm:$0xf]
    %v51 = vld [vmem:[%s1 + $0x30] sm:$0xf]
    %v52 = vld [vmem:[%s1 + $0x34] sm:$0xf]
    %v53 = vld [vmem:[%s1 + $0x38] sm:$0xf]
    %v54 = vld [vmem:[%s1 + $0x3c] sm:$0xf]
    %v55 = vld [vmem:[%s1 + $0x40] sm:$0xf]
    %v56 = vld [vmem:[%s1 + $0x44] sm:$0xf]
    %v57 = vld [vmem:[%s1 + $0x48] sm:$0xf]
    %v58 = vld [vmem:[%s1 + $0x4c] sm:$0xf]
    %v59 = vld [vmem:[%s1 + $0x50] sm:$0xf]
    %v60 = vld [vmem:[%s1 + $0x54] sm:$0xf]
    %v61 = vld [vmem:[%s1 + $0x58] sm:$0xf]
    %v62 = vld [vmem:[%s1 + $0x5c] sm:$0xf]
    %v63 = vld [vmem:[%s1 + $0x60] sm:$0xf]
    %v64 = vld [vmem:[%s1 + $0x64] sm:$0xf]
    %v65 = vld [vmem:[%s1 + $0x68] sm:$0xf]
    %v66 = vld [vmem:[%s1 + $0x6c] sm:$0xf]
    %v67 = vld [vmem:[%s1 + $0x70] sm:$0xf]
    %v68 = vld [vmem:[%s1 + $0x74] sm:$0xf]
    %v69 = vld [vmem:[%s1 + $0x78] sm:$0xf]
    %v70 = vld [vmem:[%s1 + $0x7c] sm:$0xf]
    %v71 = vld [vmem:[%s1 + $0x80] sm:$0xf]
    %v72 = vld [vmem:[%s1 + $0x84] sm:$0xf]
    %v73 = vld [vmem:[%s1 + $0x88] sm:$0xf]
    %v74 = vld [vmem:[%s1 + $0x8c] sm:$0xf]
    %v75 = vld [vmem:[%s1 + $0x90] sm:$0xf]
    %v76 = vld [vmem:[%s1 + $0x94] sm:$0xf]
    %v77 = vld [vmem:[%s1 + $0x98] sm:$0xf]
    %v78 = vld [vmem:[%s1 + $0x9c] sm:$0xf]
    %v79 = vld [vmem:[%s1 + $0xa0] sm:$0xf]
    %v80 = vld [vmem:[%s1 + $0xa4] sm:$0xf]
    %v81 = vld [vmem:[%s1 + $0xa8] sm:$0xf]
    %v82 = vld [vmem:[%s1 + $0xac] sm:$0xf]
    %v83 = vld [vmem:[%s1 + $0xb0] sm:$0xf]
    %v84 = vld [vmem:[%s1 + $0xb4] sm:$0xf]
    %v85 = vld [vmem:[%s1 + $0xb8] sm:$0xf]
    %v86 = vld [vmem:[%s1 + $0xbc] sm:$0xf]
    %v87 = vld [vmem:[%s1 + $0xc0] sm:$0xf]
    %v88 = vld [vmem:[%s1 + $0xc4] sm:$0xf]
    %v89 = vld [vmem:[%s1 + $0xc8] sm:$0xf]
    %v90 = vld [vmem:[%s1 + $0xcc] sm:$0xf]
    %v91 = vld [vmem:[%s1 + $0xd0] sm:$0xf]
    %v92 = vld [vmem:[%s1 + $0xd4] sm:$0xf]
    %v93 = vld [vmem:[%s1 + $0xd8] sm:$0xf]
    %v94 = vld [vmem:[%s1 + $0xdc] sm:$0xf]
    %v95 = vld [vmem:[%s1 + $0xe0] sm:$0xf]
    %v96 = vld [vmem:[%s1 + $0xe4] sm:$0xf]
    %v97 = vld [vmem:[%s1 + $0xe8] sm:$0xf]
    %v98 = vld [vmem:[%s1 + $0xec] sm:$0xf]
    %v99 = vld [vmem:[%s1 + $0xf0] sm:$0xf]
    %v100 = vld [vmem:[%s1 + $0xf4] sm:$0xf]
    %v101 = vld [vmem:[%s1 + $0xf8] sm:$0xf]
    %v102 = vld [vmem:[%s1 + $0xfc] sm:$0xf]
    %v103 = vld [vmem:[%s2] sm:$0x1]
    %v105 = vperm.slane %v103, 0
    %v171 = vunpack.c.l.b16 %v39
    %v172 = vunpack.c.l.b16 %v40
    %v173 = vunpack.c.l.b16 %v41
    %v174 = vunpack.c.l.b16 %v42
    %v175 = vunpack.c.l.b16 %v43
    %v176 = vunpack.c.l.b16 %v44
    %v177 = vunpack.c.l.b16 %v45
    %v178 = vunpack.c.l.b16 %v46
    %v179 = vunpack.c.l.b16 %v47
    %v180 = vunpack.c.l.b16 %v48
    %v181 = vunpack.c.l.b16 %v49
    %v182 = vunpack.c.l.b16 %v50
    %v183 = vunpack.c.l.b16 %v51
    %v184 = vunpack.c.l.b16 %v52
    %v185 = vunpack.c.l.b16 %v53
    %v186 = vunpack.c.l.b16 %v54
    %v187 = vunpack.c.l.b16 %v55
    %v188 = vunpack.c.l.b16 %v56
    %v189 = vunpack.c.l.b16 %v57
    %v190 = vunpack.c.l.b16 %v58
    %v191 = vunpack.c.l.b16 %v59
    %v192 = vunpack.c.l.b16 %v60
    %v193 = vunpack.c.l.b16 %v61
    %v194 = vunpack.c.l.b16 %v62
    %v195 = vunpack.c.l.b16 %v63
    %v196 = vunpack.c.l.b16 %v64
    %v197 = vunpack.c.l.b16 %v65
    %v198 = vunpack.c.l.b16 %v66
    %v199 = vunpack.c.l.b16 %v67
    %v200 = vunpack.c.l.b16 %v68
    %v201 = vunpack.c.l.b16 %v69
    %v202 = vunpack.c.l.b16 %v70
    %v203 = vunpack.c.l.b16 %v71
    %v204 = vunpack.c.l.b16 %v72
    %v205 = vunpack.c.l.b16 %v73
    %v206 = vunpack.c.l.b16 %v74
    %v207 = vunpack.c.l.b16 %v75
    %v208 = vunpack.c.l.b16 %v76
    %v209 = vunpack.c.l.b16 %v77
    %v210 = vunpack.c.l.b16 %v78
    %v211 = vunpack.c.l.b16 %v79
    %v212 = vunpack.c.l.b16 %v80
    %v213 = vunpack.c.l.b16 %v81
    %v214 = vunpack.c.l.b16 %v82
    %v215 = vunpack.c.l.b16 %v83
    %v216 = vunpack.c.l.b16 %v84
    %v217 = vunpack.c.l.b16 %v85
    %v218 = vunpack.c.l.b16 %v86
    %v219 = vunpack.c.l.b16 %v87
    %v220 = vunpack.c.l.b16 %v88
    %v221 = vunpack.c.l.b16 %v89
    %v222 = vunpack.c.l.b16 %v90
    %v223 = vunpack.c.l.b16 %v91
    %v224 = vunpack.c.l.b16 %v92
    %v225 = vunpack.c.l.b16 %v93
    %v226 = vunpack.c.l.b16 %v94
    %v227 = vunpack.c.l.b16 %v95
    %v228 = vunpack.c.l.b16 %v96
    %v229 = vunpack.c.l.b16 %v97
    %v230 = vunpack.c.l.b16 %v98
    %v231 = vunpack.c.l.b16 %v99
    %v232 = vunpack.c.l.b16 %v100
    %v233 = vunpack.c.l.b16 %v101
    %v234 = vunpack.c.l.b16 %v102
    %v235 = vpack.c.b16 %v172, %v171
    %v236 = vpack.c.b16 %v174, %v173
    %v237 = vpack.c.b16 %v176, %v175
    %v238 = vpack.c.b16 %v178, %v177
    %v239 = vpack.c.b16 %v180, %v179
    %v240 = vpack.c.b16 %v182, %v181
    %v241 = vpack.c.b16 %v184, %v183
    %v242 = vpack.c.b16 %v186, %v185
    %v243 = vpack.c.b16 %v188, %v187
    %v244 = vpack.c.b16 %v190, %v189
    %v245 = vpack.c.b16 %v192, %v191
    %v246 = vpack.c.b16 %v194, %v193
    %v247 = vpack.c.b16 %v196, %v195
    %v248 = vpack.c.b16 %v198, %v197
    %v249 = vpack.c.b16 %v200, %v199
    %v250 = vpack.c.b16 %v202, %v201
    %v251 = vpack.c.b16 %v204, %v203
    %v252 = vpack.c.b16 %v206, %v205
    %v253 = vpack.c.b16 %v208, %v207
    %v254 = vpack.c.b16 %v210, %v209
    %v255 = vpack.c.b16 %v212, %v211
    %v256 = vpack.c.b16 %v214, %v213
    %v257 = vpack.c.b16 %v216, %v215
    %v258 = vpack.c.b16 %v218, %v217
    %v259 = vpack.c.b16 %v220, %v219
    %v260 = vpack.c.b16 %v222, %v221
    %v261 = vpack.c.b16 %v224, %v223
    %v262 = vpack.c.b16 %v226, %v225
    %v263 = vpack.c.b16 %v228, %v227
    %v264 = vpack.c.b16 %v230, %v229
    %v265 = vpack.c.b16 %v232, %v231
    %v266 = vpack.c.b16 %v234, %v233
    %299 = vmatpush.bf16.msra.mxu0 %v242
    %300 = vmatpush.bf16.msra.mxu0 %v241
    %301 = vmatpush.bf16.msra.mxu0 %v240
    %302 = vmatpush.bf16.msra.mxu0 %v239
    %303 = vmatpush.bf16.msra.mxu0 %v238
    %304 = vmatpush.bf16.msra.mxu0 %v237
    %305 = vmatpush.bf16.msra.mxu0 %v236
    %306 = vmatpush.bf16.msra.mxu0 %v235
    %307 = vmatmul.bf16.gmra.mxu0 %v35
    %v308 = vpop.f32.mrf.mxu0
    %v309 = vadd.f32 %v105, %v308
    %v310 = vpop.f32.mrf.mxu0
    %v311 = vadd.f32 %v105, %v310
    %312 = vdwg.mxu0
    %313 = vmatpush.bf16.msra.mxu0 %v250
    %314 = vmatpush.bf16.msra.mxu0 %v249
    %315 = vmatpush.bf16.msra.mxu0 %v248
    %316 = vmatpush.bf16.msra.mxu0 %v247
    %317 = vmatpush.bf16.msra.mxu0 %v246
    %318 = vmatpush.bf16.msra.mxu0 %v245
    %319 = vmatpush.bf16.msra.mxu0 %v244
    %320 = vmatpush.bf16.msra.mxu0 %v243
    %321 = vmatmul.bf16.gmra.mxu0 %v36
    %v322 = vpop.f32.mrf.mxu0
    %v323 = vadd.f32 %v309, %v322
    %v324 = vpop.f32.mrf.mxu0
    %v325 = vadd.f32 %v311, %v324
    %326 = vdwg.mxu0
    %327 = vmatpush.bf16.msra.mxu0 %v258
    %328 = vmatpush.bf16.msra.mxu0 %v257
    %329 = vmatpush.bf16.msra.mxu0 %v256
    %330 = vmatpush.bf16.msra.mxu0 %v255
    %331 = vmatpush.bf16.msra.mxu0 %v254
    %332 = vmatpush.bf16.msra.mxu0 %v253
    %333 = vmatpush.bf16.msra.mxu0 %v252
    %334 = vmatpush.bf16.msra.mxu0 %v251
    %335 = vmatmul.bf16.gmra.mxu0 %v37
    %v336 = vpop.f32.mrf.mxu0
    %v337 = vadd.f32 %v323, %v336
    %v338 = vpop.f32.mrf.mxu0
    %v339 = vadd.f32 %v325, %v338
    %340 = vdwg.mxu0
    %341 = vmatpush.bf16.msra.mxu0 %v266
    %342 = vmatpush.bf16.msra.mxu0 %v265
    %343 = vmatpush.bf16.msra.mxu0 %v264
    %344 = vmatpush.bf16.msra.mxu0 %v263
    %345 = vmatpush.bf16.msra.mxu0 %v262
    %346 = vmatpush.bf16.msra.mxu0 %v261
    %347 = vmatpush.bf16.msra.mxu0 %v260
    %348 = vmatpush.bf16.msra.mxu0 %v259
    %349 = vmatmul.bf16.gmra.mxu0 %v38
    %v350 = vpop.f32.mrf.mxu0
    %v351 = vadd.f32 %v337, %v350
    %v352 = vpop.f32.mrf.mxu0
    %v353 = vadd.f32 %v339, %v352
    %354 = vdwg.mxu0
    %v355 = vtanh.pop %v351
    %v356 = vtanh.pop %v353
    %v357 = vlaneseq
    %v358 = vand.u32 %v357, 127
    %vm359 = vcmp.lt.s32.totalorder %v358, 10
    %v360 = vsel %vm359, 1, 0
    %v361 = vcvt.s32.f32 %v360
    %vm362 = vcmask 130048
    %v364 = vsel %vm362, %v361, 0
    %366 = vmatpush.msra.mxu0 0.0
    %367 = vmatpush.msra.mxu0 0.0
    %368 = vmatpush.msra.mxu0 0.0
    %369 = vmatpush.msra.mxu0 0.0
    %370 = vmatpush.msra.mxu0 0.0
    %371 = vmatpush.msra.mxu0 0.0
    %372 = vmatpush.msra.mxu0 0.0
    %373 = vmatpush.msra.mxu0 0.0
    %374 = vmatpush.msra.mxu0 0.0
    %375 = vmatpush.msra.mxu0 0.0
    %376 = vmatpush.msra.mxu0 0.0
    %377 = vmatpush.msra.mxu0 0.0
    %378 = vmatpush.msra.mxu0 0.0
    %379 = vmatpush.msra.mxu0 0.0
    %380 = vmatpush.msra.mxu0 %v356
    %381 = vmatpush.msra.mxu0 %v355
    %382 = vmatmul.f32.gmra.mxu0 %v364
    %v383 = vpop.f32.mrf.mxu0
    %v384 = vadd.f32 0.0, %v383
    %385 = vdwg.mxu0
    %v386 = vmul.f32 %v384, 0.1
    %v387 = vmul.f32 %v355, %v355
    %v388 = vmul.f32 %v356, %v356
    %389 = vmatpush.msra.mxu0 0.0
    %390 = vmatpush.msra.mxu0 0.0
    %391 = vmatpush.msra.mxu0 0.0
    %392 = vmatpush.msra.mxu0 0.0
    %393 = vmatpush.msra.mxu0 0.0
    %394 = vmatpush.msra.mxu0 0.0
    %395 = vmatpush.msra.mxu0 0.0
    %396 = vmatpush.msra.mxu0 0.0
    %397 = vmatpush.msra.mxu0 0.0
    %398 = vmatpush.msra.mxu0 0.0
    %399 = vmatpush.msra.mxu0 0.0
    %400 = vmatpush.msra.mxu0 0.0
    %401 = vmatpush.msra.mxu0 0.0
    %402 = vmatpush.msra.mxu0 0.0
    %403 = vmatpush.msra.mxu0 %v388
    %404 = vmatpush.msra.mxu0 %v387
    %405 = vmatmul.f32.gmra.mxu0 %v364
    %v406 = vpop.f32.mrf.mxu0
    %v407 = vadd.f32 0.0, %v406
    %408 = vdwg.mxu0
    %v409 = vmul.f32 %v407, 0.1
    %v410 = vmul.f32 %v386, %v386
    %v411 = vsub.f32 %v409, %v410
    %v412 = vld [vmem:[%s3] sm:$0x1]
    %v413 = vadd.f32 %v411, 1e-05
    %v414 = vrsqrt.pop %v413
    %v415 = vmul.f32 %v414, %v413
    %v416 = vmul.f32 %v415, %v414
    %v417 = vmul.f32 0.5, %v416
    %v418 = vsub.f32 1.5, %v417
    %v419 = vmul.f32 %v414, %v418
    %vm420 = vweird.f32 %v413
    %vm421 = vweird.f32 %v414
    %vm422 = vmor %vm420, %vm421
    %v423 = vsel %vm422, %v414, %v419
    %v424 = vmul.f32 %v412, %v423
    %v425 = vld [vmem:[%s4] sm:$0x1]
    %v426 = vmul.f32 %v386, %v424
    %v427 = vsub.f32 %v425, %v426
    %v429 = vperm.slane %v424, 0
    %v431 = vmul.f32 %v355, %v429
    %v432 = vmul.f32 %v356, %v429
    %v434 = vperm.slane %v427, 0
    %v436 = vadd.f32 %v431, %v434
    %v437 = vadd.f32 %v432, %v434
    %v438 = vpack.c.bf16 %v437, %v436
    %v439 = vld [vmem:[%s5] sm:$0xf]
    %v440 = vld [vmem:[%s5 + $0x4] sm:$0xf]
    %v441 = vld [vmem:[%s5 + $0x8] sm:$0xf]
    %v442 = vld [vmem:[%s5 + $0xc] sm:$0xf]
    %v443 = vld [vmem:[%s5 + $0x10] sm:$0xf]
    %v444 = vld [vmem:[%s5 + $0x14] sm:$0xf]
    %v445 = vld [vmem:[%s5 + $0x18] sm:$0xf]
    %v446 = vld [vmem:[%s5 + $0x1c] sm:$0xf]
    %v447 = vld [vmem:[%s5 + $0x20] sm:$0xf]
    %v448 = vld [vmem:[%s5 + $0x24] sm:$0xf]
    %v449 = vld [vmem:[%s5 + $0x28] sm:$0xf]
    %v450 = vld [vmem:[%s5 + $0x2c] sm:$0xf]
    %v451 = vld [vmem:[%s5 + $0x30] sm:$0xf]
    %v452 = vld [vmem:[%s5 + $0x34] sm:$0xf]
    %v453 = vld [vmem:[%s5 + $0x38] sm:$0xf]
    %v454 = vld [vmem:[%s5 + $0x3c] sm:$0xf]
    %v455 = vld [vmem:[%s6] sm:$0x1]
    %v457 = vperm.slane %v455, 0
    %v475 = vunpack.c.l.b16 %v439
    %v476 = vunpack.c.l.b16 %v440
    %v477 = vunpack.c.l.b16 %v441
    %v478 = vunpack.c.l.b16 %v442
    %v479 = vunpack.c.l.b16 %v443
    %v480 = vunpack.c.l.b16 %v444
    %v481 = vunpack.c.l.b16 %v445
    %v482 = vunpack.c.l.b16 %v446
    %v483 = vunpack.c.l.b16 %v447
    %v484 = vunpack.c.l.b16 %v448
    %v485 = vunpack.c.l.b16 %v449
    %v486 = vunpack.c.l.b16 %v450
    %v487 = vunpack.c.l.b16 %v451
    %v488 = vunpack.c.l.b16 %v452
    %v489 = vunpack.c.l.b16 %v453
    %v490 = vunpack.c.l.b16 %v454
    %v491 = vpack.c.b16 %v476, %v475
    %v492 = vpack.c.b16 %v478, %v477
    %v493 = vpack.c.b16 %v480, %v479
    %v494 = vpack.c.b16 %v482, %v481
    %v495 = vpack.c.b16 %v484, %v483
    %v496 = vpack.c.b16 %v486, %v485
    %v497 = vpack.c.b16 %v488, %v487
    %v498 = vpack.c.b16 %v490, %v489
    %507 = vmatpush.bf16.msra.mxu0 %v498
    %508 = vmatpush.bf16.msra.mxu0 %v497
    %509 = vmatpush.bf16.msra.mxu0 %v496
    %510 = vmatpush.bf16.msra.mxu0 %v495
    %511 = vmatpush.bf16.msra.mxu0 %v494
    %512 = vmatpush.bf16.msra.mxu0 %v493
    %513 = vmatpush.bf16.msra.mxu0 %v492
    %514 = vmatpush.bf16.msra.mxu0 %v491
    %515 = vmatmul.bf16.gmra.mxu0 %v438
    %v516 = vpop.f32.mrf.mxu0
    %v517 = vadd.f32 %v457, %v516
    %v518 = vpop.f32.mrf.mxu0
    %v519 = vadd.f32 %v457, %v518
    %520 = vdwg.mxu0
    %521 = vst [vmem:[#allocation2] sm:$0xff] %v517
    %522 = vst [vmem:[#allocation2 + $0x8] sm:$0xff] %v519
    // Predicated region
    $region30: #{pocket_decoder.1} parent=1 // pred_check
      _
    $region31: #{pocket_decoder.1} parent=1 // pred_check_branch
      %524 = sbr.rel (0) target = $region33
    $region32: #{pocket_decoder.1} parent=1 // pred_region
      %526 = vsyncadd [#allocation3], 0
      %s527 = sshll.u32 [#allocation2], 4
      %s528 = int_to_ptr.vmem [resolvable:$true] %s527
      %s529 = sshll.u32 %s7, 4
      %s530 = int_to_ptr.hbm [resolvable:$true] %s529
      %535 = dma.vmem_to_hbm [thread:$0]  %s528, 256, %s530, [#allocation3], 128, 128, 8
    $region33: #{pocket_decoder.1} parent=1 // pred_fallthru
      _
    // Predicated region
    $region34: #{pocket_decoder.1} parent=1 // pred_check
      _
    $region35: #{pocket_decoder.1} parent=1 // pred_check_branch
      %537 = sbr.rel (0) target = $region37
    $region36: #{pocket_decoder.1} parent=1 // pred_region
      %539 = dma.done [#allocation3], 256
    $region37: #{pocket_decoder.1} parent=1 // pred_fallthru
      _
    %540 = vsyncpa [#allocation3], 1

</llo_original>
